<compile_context>
chip_gen: v5e
topology: v5e:2x2
jax: 0.10.0
libtpu: 0.0.40
codegen_flags: <defaults>
</compile_context>

<pallas_src>
import functools
from abc import ABC, abstractmethod

import jax
import jax.numpy as jnp
from jax.experimental import pallas as pl
from jax.experimental.pallas import tpu as pltpu


# ----------------------------------------------------------------------------
# Helpers
# ----------------------------------------------------------------------------
def _round_up(x, m):
    return ((x + m - 1) // m) * m


def _sublane_multiple(dtype):
    """Sublane packing requirement for the second-to-last dim of a block."""
    itemsize = jnp.dtype(dtype).itemsize
    return max(8, 32 // max(itemsize, 1))  # f32->8, bf16->16, 8-bit->32


# ----------------------------------------------------------------------------
# Kernels: y = x @ W + b   (MXU matmul, f32 accumulate, bias on final step)
# ----------------------------------------------------------------------------
def _linear_kernel_single_k(x_ref, w_ref, b_ref, o_ref):
    # One K step: no accumulator scratch -> no extra (tm, tn) f32 VMEM traffic.
    o_ref[...] = (
        jnp.dot(x_ref[...], w_ref[...], preferred_element_type=jnp.float32)
        + b_ref[...]
    ).astype(o_ref.dtype)


def _linear_kernel_multi_k(x_ref, w_ref, b_ref, o_ref, acc_ref):
    # x_ref: (tm, tk), w_ref: (tk, tn), b_ref: (1, tn), o_ref: (tm, tn)
    k = pl.program_id(2)

    @pl.when(k == 0)
    def _init():
        acc_ref[...] = jnp.zeros_like(acc_ref)

    acc_ref[...] += jnp.dot(
        x_ref[...], w_ref[...], preferred_element_type=jnp.float32
    )

    @pl.when(k == pl.num_programs(2) - 1)
    def _finalize():
        # Bias add + cast happen exactly once per output tile.
        o_ref[...] = (acc_ref[...] + b_ref[...]).astype(o_ref.dtype)


# ----------------------------------------------------------------------------
# pallas_call on tile-aligned operands
# ----------------------------------------------------------------------------
def _pallas_affine(x_p, w_p, b_p, *, tm, tn, tk, out_dtype):
    M, K = x_p.shape
    N = w_p.shape[1]
    nm, nn, nk = M // tm, N // tn, K // tk

    in_bytes = jnp.dtype(x_p.dtype).itemsize
    out_bytes = jnp.dtype(out_dtype).itemsize
    flops = 2 * M * N * K
    bytes_accessed = (M * K + K * N + N) * in_bytes + M * N * out_bytes

    if nk == 1:
        grid = (nm, nn)
        kernel = _linear_kernel_single_k
        in_specs = [
            pl.BlockSpec((tm, tk), lambda i, j: (i, 0)),
            pl.BlockSpec((tk, tn), lambda i, j: (0, j)),
            pl.BlockSpec((1, tn), lambda i, j: (0, j)),
        ]
        out_specs = pl.BlockSpec((tm, tn), lambda i, j: (i, j))
        scratch_shapes = []
        dim_sem = ("parallel", "parallel")
        acc_bytes = 0
    else:
        grid = (nm, nn, nk)
        kernel = _linear_kernel_multi_k
        in_specs = [
            pl.BlockSpec((tm, tk), lambda i, j, k: (i, k)),
            pl.BlockSpec((tk, tn), lambda i, j, k: (k, j)),
            pl.BlockSpec((1, tn), lambda i, j, k: (0, j)),
        ]
        out_specs = pl.BlockSpec((tm, tn), lambda i, j, k: (i, j))
        scratch_shapes = [pltpu.VMEM((tm, tn), jnp.float32)]
        dim_sem = ("parallel", "parallel", "arbitrary")
        acc_bytes = tm * tn * 4

    # Double-buffered VMEM footprint + headroom; capped well under v7x's 64 MiB/TC.
    tile_bytes = (tm * tk + tk * tn + tn) * in_bytes + tm * tn * out_bytes
    footprint = 2 * tile_bytes + acc_bytes
    vmem_limit = int(min(48 * 1024 * 1024, max(32 * 1024 * 1024, 2 * footprint)))

    return pl.pallas_call(
        kernel,
        out_shape=jax.ShapeDtypeStruct((M, N), out_dtype),
        grid_spec=pltpu.PrefetchScalarGridSpec(
            num_scalar_prefetch=0,
            grid=grid,
            in_specs=in_specs,
            out_specs=out_specs,
            scratch_shapes=scratch_shapes,
        ),
        compiler_params=pltpu.CompilerParams(
            # M / N tiles are independent -> shard across v7x's two TensorCores;
            # near-neutral (but harmless) on single-TC v5e/v6e.
            dimension_semantics=dim_sem,
            vmem_limit_bytes=vmem_limit,
        ),
        cost_estimate=pl.CostEstimate(
            flops=flops, transcendentals=0, bytes_accessed=bytes_accessed
        ),
    )(x_p, w_p, b_p)


# ----------------------------------------------------------------------------
# Jitted forward over pre-padded parameters (x pad + slice fuse under jit)
# ----------------------------------------------------------------------------
@functools.partial(jax.jit, static_argnames=("tm", "tn", "tk", "d_out"))
def _forward_prepadded(x, w_p, b_p, *, tm, tn, tk, d_out):
    B, D_in = x.shape
    K, N = w_p.shape

    sub = _sublane_multiple(x.dtype)
    M = _round_up(B, sub)
    tm_eff = min(tm, M)
    M = _round_up(M, tm_eff)

    if (M, K) != (B, D_in):
        x = jnp.pad(x, ((0, M - B), (0, K - D_in)))

    out = _pallas_affine(x, w_p, b_p, tm=tm_eff, tn=tn, tk=tk, out_dtype=x.dtype)

    if (M, N) == (B, d_out):
        return out  # aligned shapes: no slice copy at all
    return out[:B, :d_out]


def _pad_params(w, b, *, tn, tk):
    """Zero-pad W:(D_in, D_out) and b to tile-aligned (K, N) / (1, N). Done once."""
    D_in, D_out = w.shape
    K = _round_up(D_in, 128)   # MXU feed alignment
    N = _round_up(D_out, 128)  # lane-dense output stores
    tk = min(tk, K)
    tn = min(tn, N)
    K = _round_up(K, tk)
    N = _round_up(N, tn)
    if (K, N) != (D_in, D_out):
        w = jnp.pad(w, ((0, K - D_in), (0, N - D_out)))
    b = jnp.reshape(b, (1, -1))
    if b.shape[1] != N:
        b = jnp.pad(b, ((0, 0), (0, N - b.shape[1])))
    return w, b, tn, tk


def linear_decoder_forward(x, w, b, *, tm=256, tn=1024, tk=512):
    """Convenience entry: pads W/b per call (use LinearDecoder for cached padding)."""
    d_out = w.shape[1]
    w_p, b_p, tn_eff, tk_eff = _pad_params(w, b, tn=tn, tk=tk)
    return _forward_prepadded(
        x, w_p, b_p, tm=tm, tn=tn_eff, tk=tk_eff, d_out=d_out
    )


# ----------------------------------------------------------------------------
# JAX-side port of the AbstractDecoder contract + minimal concrete decoder
# ----------------------------------------------------------------------------
class AbstractDecoder(ABC):
    """JAX/Pallas port of the abstract decoder contract (lazy init, (B, in)->(B, out))."""

    def __init__(self):
        self.is_initialized = False

    @abstractmethod
    def initialize(self, input_size):
        self.input_size = input_size
        self.is_initialized = True

    @abstractmethod
    def forward(self, x):
        if not self.is_initialized:
            raise RuntimeError(
                "The decoder model is not initialized. Call `initialize` first."
            )

    @property
    @abstractmethod
    def model_name(self):
        pass


class LinearDecoder(AbstractDecoder):
    """Minimal concrete decoder: one affine layer as a tiled Pallas TPU kernel."""

    def __init__(self, output_size, param_dtype=jnp.float32, tm=256, tn=1024, tk=512):
        super().__init__()
        self.output_size = output_size
        # TODO(synk): for the memory-bound small-batch regime, store W in bf16
        # (fp8 on v7x); f32 MXU accumulation stays intact via preferred_element_type.
        # Kept f32 here to hold the 1e-5 reference tolerance in the self-test.
        self.param_dtype = param_dtype
        self._tm, self._tn, self._tk = tm, tn, tk

    def initialize(self, input_size):
        super().initialize(input_size)
        # Deterministic parameter init (synthetic; no checkpoint loading).
        key = jax.random.PRNGKey(42)
        kw, kb = jax.random.split(key)
        scale = 1.0 / jnp.sqrt(jnp.float32(input_size))
        self.w = (
            jax.random.normal(kw, (input_size, self.output_size), dtype=jnp.float32)
            * scale
        ).astype(self.param_dtype)
        self.b = (
            jax.random.normal(kb, (1, self.output_size), dtype=jnp.float32) * 0.01
        ).astype(self.param_dtype)
        # Pre-pad + cache padded parameters ONCE (no per-forward KxN pad traffic).
        self._w_p, self._b_p, self._tn_eff, self._tk_eff = _pad_params(
            self.w, self.b, tn=self._tn, tk=self._tk
        )

    def forward(self, x):
        if not self.is_initialized:
            raise RuntimeError(
                "The decoder model is not initialized. Call `initialize` first."
            )
        return _forward_prepadded(
            x.astype(self.param_dtype),
            self._w_p,
            self._b_p,
            tm=self._tm,
            tn=self._tn_eff,
            tk=self._tk_eff,
            d_out=self.output_size,
        )

    @property
    def model_name(self):
        return "LINEAR_PALLAS"


# ----------------------------------------------------------------------------
# Self-test
# ----------------------------------------------------------------------------
if __name__ == "__main__":
    # Case 1: small shapes consistent with the module (x: (batch, input_size)).
    # D_in=32 pads to one 128-wide K block -> exercises the single-K fast path.
    batch, input_size, output_size = 8, 32, 64
    key = jax.random.PRNGKey(0)
    x = jax.random.normal(key, (batch, input_size), dtype=jnp.float32)

    dec = LinearDecoder(output_size=output_size)
    dec.initialize(input_size)

    y = jax.block_until_ready(dec.forward(x))
    y_ref = x @ dec.w + dec.b
    assert y.shape == (batch, output_size), y.shape
    assert jnp.allclose(y, y_ref, atol=1e-5, rtol=1e-5), "mismatch vs reference (small)"

    # Case 2: unaligned, multi-tile shapes — exercises the K-accumulation kernel,
    # padding, the pl.when init/finalize path, and the output slice.
    batch2, in2, out2 = 16, 300, 200
    k2 = jax.random.PRNGKey(1)
    x2 = jax.random.normal(k2, (batch2, in2), dtype=jnp.float32)
    dec2 = LinearDecoder(output_size=out2)
    dec2.initialize(in2)
    y2 = jax.block_until_ready(
        linear_decoder_forward(x2, dec2.w, dec2.b, tm=8, tn=128, tk=128)
    )
    y2_ref = x2 @ dec2.w + dec2.b
    assert y2.shape == (batch2, out2), y2.shape
    assert jnp.allclose(y2, y2_ref, atol=1e-4, rtol=1e-4), "mismatch vs reference (tiled)"

    print("KERNEL_OK")
</pallas_src>

<mosaic_0001>
module attributes {stable_mosaic.version = 11 : i64} {
  func.func @_linear_kernel_single_k(%arg0: i32, %arg1: i32, %arg2: memref<8x128xf32, #tpu.memory_space<vmem>>, %arg3: memref<128x128xf32, #tpu.memory_space<vmem>>, %arg4: memref<1x128xf32, #tpu.memory_space<vmem>>, %arg5: memref<8x128xf32, #tpu.memory_space<vmem>>) attributes {dimension_semantics = [#tpu.dimension_semantics<parallel>, #tpu.dimension_semantics<parallel>], iteration_bounds = array<i64: 1, 1>, scalar_prefetch = 0 : i64, scratch_operands = 0 : i64, tpu.core_type = #tpu.core_type<tc>, window_params = [{transform_indices = @transform_0, window_bounds = array<i64: 8, 128>}, {transform_indices = @transform_1, window_bounds = array<i64: 128, 128>}, {transform_indices = @transform_2, window_bounds = array<i64: 1, 128>}, {transform_indices = @transform_3, window_bounds = array<i64: 8, 128>}]} {
    %c0 = arith.constant 0 : index
    %c0_0 = arith.constant 0 : index
    %0 = vector.load %arg2[%c0, %c0_0] : memref<8x128xf32, #tpu.memory_space<vmem>>, vector<8x128xf32>
    %c0_1 = arith.constant 0 : index
    %c0_2 = arith.constant 0 : index
    %1 = vector.load %arg3[%c0_1, %c0_2] : memref<128x128xf32, #tpu.memory_space<vmem>>, vector<128x128xf32>
    %cst = arith.constant dense<0.000000e+00> : vector<8x128xf32>
    %2 = tpu.matmul %0, %1, %cst {dimension_numbers = #tpu.dot_dimension_numbers<[1], [0], [0], [1], [0, 0, 1, 1], [], []>} : vector<8x128xf32>, vector<128x128xf32>, vector<8x128xf32> -> vector<8x128xf32>
    %c0_3 = arith.constant 0 : index
    %c0_4 = arith.constant 0 : index
    %3 = vector.load %arg4[%c0_3, %c0_4] : memref<1x128xf32, #tpu.memory_space<vmem>>, vector<1x128xf32>
    %4 = vector.broadcast %3 : vector<1x128xf32> to vector<8x128xf32>
    %5 = arith.addf %2, %4 : vector<8x128xf32>
    %c0_5 = arith.constant 0 : index
    %c0_6 = arith.constant 0 : index
    %6 = vector.load %arg5[%c0_5, %c0_6] : memref<8x128xf32, #tpu.memory_space<vmem>>, vector<8x128xf32>
    tpu.vector_store %arg5[%c0_5, %c0_6], %5 {strides = array<i32>} : memref<8x128xf32, #tpu.memory_space<vmem>>, vector<8x128xf32>,
    return
  }
  func.func @transform_0(%arg0: i32, %arg1: i32) -> (i32, i32) {
    %c0_i32 = arith.constant 0 : i32
    %c0_i32_0 = arith.constant 0 : i32
    return %arg0, %c0_i32 : i32, i32
  }
  func.func @transform_1(%arg0: i32, %arg1: i32) -> (i32, i32) {
    %c0_i32 = arith.constant 0 : i32
    %c0_i32_0 = arith.constant 0 : i32
    return %c0_i32, %arg1 : i32, i32
  }
  func.func @transform_2(%arg0: i32, %arg1: i32) -> (i32, i32) {
    %c0_i32 = arith.constant 0 : i32
    %c0_i32_0 = arith.constant 0 : i32
    return %c0_i32, %arg1 : i32, i32
  }
  func.func @transform_3(%arg0: i32, %arg1: i32) -> (i32, i32) {
    %c0_i32 = arith.constant 0 : i32
    return %arg0, %arg1 : i32, i32
  }
}

</mosaic_0001>

<llo_original>
// kernel: _forward_prepadded.1
$region0: #{_forward_prepadded.1}
  #allocation0 [shape = 'u32[]', space=smem, size = 0x4, offset = 0x4, fixed_abs, tag = 'smem constant byte address 0x4 - core index']
  #allocation1 [shape = 'u32[72,128]{1,0:T(1,128)}', space=vmem, size = 0x9000, scoped, tag = 'internal scratch']
  %s0 = inlined_call_operand.vmem [shape: f32[8,128], index: 0, kind: input, shape index: {}]
  %s1 = inlined_call_operand.hbm [shape: f32[128,128], index: 1, kind: input, shape index: {}]
  %s2 = inlined_call_operand.vmem [shape: f32[1,128], index: 2, kind: input, shape index: {}]
  %s3 = inlined_call_operand.hbm [shape: f32[8,128], index: 3, kind: output, shape index: {}]
  %s4 = sld [smem:[#allocation0]]
  $region26: #{_forward_prepadded.1} parent=0
    _
  %s6 = ssub.s32 1, %s4
  %s7 = scalar_select 0, %s6, %s4
  $region1: #{_forward_prepadded.1} parent=0
    #allocation2 [shape = 'u8[65536]{0}', space=vmem, size = 0x10000, scoped, tag = 'input window, operand 1, single buffered']
    #allocation3 [shape = 's32[1]{0}', space=sflag, size = 0x4, scoped, tag = 'scoped memory for _forward_prepadded.1']
    #allocation4 [shape = 's32[1]{0}', space=sflag, size = 0x4, scoped, tag = 'scoped memory for _forward_prepadded.1']
    #allocation5 [shape = 'u8[4096]{0}', space=vmem, size = 0x1000, scoped, tag = 'output window, operand 0, single buffered']
    %8 = vsyncpa [#allocation3], 0
    %9 = vsyncpa [#allocation4], 0
    // Predicated region
    $region2: #{_forward_prepadded.1} parent=1 // pred_check
      _
    $region3: #{_forward_prepadded.1} parent=1 // pred_check_branch
      %11 = sbr.rel (0) target = $region5
    $region4: #{_forward_prepadded.1} parent=1 // pred_region
      _
    $region5: #{_forward_prepadded.1} parent=1 // pred_fallthru
      _
    // Predicated region
    $region6: #{_forward_prepadded.1} parent=1 // pred_check
      _
    $region7: #{_forward_prepadded.1} parent=1 // pred_check_branch
      %13 = sbr.rel (0) target = $region9
    $region8: #{_forward_prepadded.1} parent=1 // pred_region
      %15 = vsyncadd [#allocation3], 0
      %s16 = sshll.u32 %s1, 4
      %s17 = int_to_ptr.hbm [resolvable:$true] %s16
      %s18 = sshll.u32 [#allocation2], 4
      %s19 = int_to_ptr.vmem [resolvable:$true] %s18
      %24 = dma.hbm_to_vmem [thread:$0]  %s17, 2048, %s19, [#allocation3], 128, 128, 8
    $region9: #{_forward_prepadded.1} parent=1 // pred_fallthru
      _
    // Predicated region
    $region10: #{_forward_prepadded.1} parent=1 // pred_check
      _
    $region11: #{_forward_prepadded.1} parent=1 // pred_check_branch
      %26 = sbr.rel (0) target = $region13
    $region12: #{_forward_prepadded.1} parent=1 // pred_region
      _
    $region13: #{_forward_prepadded.1} parent=1 // pred_fallthru
      _
    // Predicated region
    $region14: #{_forward_prepadded.1} parent=1 // pred_check
      _
    $region15: #{_forward_prepadded.1} parent=1 // pred_check_branch
      %28 = sbr.rel (0) target = $region17
    $region16: #{_forward_prepadded.1} parent=1 // pred_region
      %30 = dma.done [#allocation3], 2048
    $region17: #{_forward_prepadded.1} parent=1 // pred_fallthru
      _
    %v31 = vld [vmem:[%s0] sm:$0xff]
    %v32 = vld [vmem:[#allocation2] sm:$0xff]
    %v33 = vld [vmem:[#allocation2 + $0x8] sm:$0xff]
    %v34 = vld [vmem:[#allocation2 + $0x10] sm:$0xff]
    %v35 = vld [vmem:[#allocation2 + $0x18] sm:$0xff]
    %v36 = vld [vmem:[#allocation2 + $0x20] sm:$0xff]
    %v37 = vld [vmem:[#allocation2 + $0x28] sm:$0xff]
    %v38 = vld [vmem:[#allocation2 + $0x30] sm:$0xff]
    %v39 = vld [vmem:[#allocation2 + $0x38] sm:$0xff]
    %v40 = vld [vmem:[#allocation2 + $0x40] sm:$0xff]
    %v41 = vld [vmem:[#allocation2 + $0x48] sm:$0xff]
    %v42 = vld [vmem:[#allocation2 + $0x50] sm:$0xff]
    %v43 = vld [vmem:[#allocation2 + $0x58] sm:$0xff]
    %v44 = vld [vmem:[#allocation2 + $0x60] sm:$0xff]
    %v45 = vld [vmem:[#allocation2 + $0x68] sm:$0xff]
    %v46 = vld [vmem:[#allocation2 + $0x70] sm:$0xff]
    %v47 = vld [vmem:[#allocation2 + $0x78] sm:$0xff]
    %v48 = vld [vmem:[%s2] sm:$0x1]
    %v50 = vperm.slane %v48, 0
    %52 = vmatpush.msra.mxu0 %v47
    %53 = vmatpush.msra.mxu0 %v46
    %54 = vmatpush.msra.mxu0 %v45
    %55 = vmatpush.msra.mxu0 %v44
    %56 = vmatpush.msra.mxu0 %v43
    %57 = vmatpush.msra.mxu0 %v42
    %58 = vmatpush.msra.mxu0 %v41
    %59 = vmatpush.msra.mxu0 %v40
    %60 = vmatpush.msra.mxu0 %v39
    %61 = vmatpush.msra.mxu0 %v38
    %62 = vmatpush.msra.mxu0 %v37
    %63 = vmatpush.msra.mxu0 %v36
    %64 = vmatpush.msra.mxu0 %v35
    %65 = vmatpush.msra.mxu0 %v34
    %66 = vmatpush.msra.mxu0 %v33
    %67 = vmatpush.msra.mxu0 %v32
    %68 = vmatmul.f32.gmra.mxu0 %v31
    %v69 = vpop.f32.mrf.mxu0
    %v70 = vadd.f32 %v50, %v69
    %71 = vdwg.mxu0
    %72 = vst [vmem:[#allocation5] sm:$0xff] %v70
    // Predicated region
    $region18: #{_forward_prepadded.1} parent=1 // pred_check
      _
    $region19: #{_forward_prepadded.1} parent=1 // pred_check_branch
      %74 = sbr.rel (0) target = $region21
    $region20: #{_forward_prepadded.1} parent=1 // pred_region
      %76 = vsyncadd [#allocation4], 0
      %s78 = sshll.u32 [#allocation5], 4
      %s79 = int_to_ptr.vmem [resolvable:$true] %s78
      %s80 = sshll.u32 %s3, 4
      %s81 = int_to_ptr.hbm [resolvable:$true] %s80
      %83 = dma.vmem_to_hbm [thread:$0]  %s79, 128, %s81, [#allocation4]
    $region21: #{_forward_prepadded.1} parent=1 // pred_fallthru
      _
    // Predicated region
    $region22: #{_forward_prepadded.1} parent=1 // pred_check
      _
    $region23: #{_forward_prepadded.1} parent=1 // pred_check_branch
      %85 = sbr.rel (0) target = $region25
    $region24: #{_forward_prepadded.1} parent=1 // pred_region
      %87 = dma.done [#allocation4], 128
    $region25: #{_forward_prepadded.1} parent=1 // pred_fallthru
      _
    %88 = vsyncpa [#allocation3], 1
    %89 = vsyncpa [#allocation4], 1

</llo_original>
